<compile_context>
chip_gen: v7x
topology: tpu7x:2x2x1
jax: 0.10.0
libtpu: 0.0.40
codegen_flags: <defaults>
</compile_context>

<pallas_src>
import functools

import jax
import jax.numpy as jnp
from jax.experimental import pallas as pl
from jax.experimental.pallas import tpu as pltpu

K = 3          # conv kernel size (both convs are 3x3, stride 1, VALID padding)
EPS = 1e-5     # BatchNorm eps (PyTorch default)


def _round_up(x, m):
    return ((x + m - 1) // m) * m


def u_block_kernel(x_ref, w1_ref, b1_ref, w2_ref, b2_ref, o_ref, *, n_imgs, h1, h2):
    """Fused U_block for the whole batch: two deep-K banded GEMMs + bias + ReLU.

    x_ref : (N*H1, K*W*Cin)   row-tap-fused input slab (bf16)
    w1_ref: (K*W*Cin, P1)     banded conv1 weights, BN scale folded, cols padded (bf16)
    b1_ref: (1, P1)           folded BN bias, column-tiled + zero-padded (f32)
    w2_ref: (K*P1, P2)        banded conv2 weights, BN scale folded, padded (bf16)
    b2_ref: (1, P2)
    o_ref : (N*H2, P2)        lane-dense (128-wide) output slab (f32)
    """
    # ---- conv1 (+BN scale in weights) : one GEMM, f32 accumulation ----
    acc1 = jnp.dot(x_ref[...], w1_ref[...], preferred_element_type=jnp.float32)
    h = jnp.maximum(acc1 + b1_ref[...], 0.0).astype(jnp.bfloat16)      # (N*H1, P1)

    # ---- build the stage-2 shifted-row LHS (per image, static unroll) ----
    per_img = []
    for n in range(n_imgs):
        base = n * h1
        taps = [h[base + ky: base + ky + h2, :] for ky in range(K)]
        per_img.append(jnp.concatenate(taps, axis=-1))                  # (H2, K*P1)
    lhs2 = jnp.concatenate(per_img, axis=0)                             # (N*H2, K*P1)

    # ---- conv2 (+BN scale in weights) : one GEMM, f32 accumulation ----
    acc2 = jnp.dot(lhs2, w2_ref[...], preferred_element_type=jnp.float32)
    o_ref[...] = jnp.maximum(acc2 + b2_ref[...], 0.0)


def band_weights(w_hwio, w_in):
    """Fold the kx taps of a KxK conv into banded GEMM weights (one-shot einsum).

    Returns wb with wb[ky, (x+kx)*Cin + ci, x*Cout + co] = w_hwio[ky, kx, ci, co],
    so that out[y, x*Cout+co] = sum_ky x_rows[y+ky, :] @ wb[ky]; zeros elsewhere.
    """
    k, _, cin, cout = w_hwio.shape
    w_out = w_in - (k - 1)
    sel = (jnp.arange(w_in)[None, :, None]
           == (jnp.arange(w_out)[None, None, :] + jnp.arange(k)[:, None, None]))
    sel = sel.astype(w_hwio.dtype)                                       # (K, W_in, W_out)
    wb = jnp.einsum('yxio,xwv->ywivo', w_hwio, sel)                      # (K,W_in,Cin,W_out,Cout)
    return wb.reshape(k, w_in * cin, w_out * cout)


def u_block_forward(x_nchw, w1_hwio, s1, b1, w2_hwio, s2, b2):
    """x_nchw: (N, Cin, H, W) -> (N, Cout, H-4, W-4), matching the PyTorch module."""
    N, Cin, H, W = x_nchw.shape
    Cmid = w1_hwio.shape[3]
    Cout = w2_hwio.shape[3]
    H1, W1 = H - (K - 1), W - (K - 1)
    H2, W2 = H1 - (K - 1), W1 - (K - 1)
    P1 = _round_up(W1 * Cmid, 128)       # padded intermediate lane width
    P2 = _round_up(W2 * Cout, 128)       # padded output lane width

    # Lane-dense, bf16, row-tap-fused input slab: (N*H1, K*W*Cin).
    x_nhwc = jnp.transpose(x_nchw, (0, 2, 3, 1))
    taps = [x_nhwc[:, ky:ky + H1, :, :].reshape(N, H1, W * Cin) for ky in range(K)]
    lhs1 = jnp.concatenate(taps, axis=-1).reshape(N * H1, K * W * Cin)
    lhs1 = lhs1.astype(jnp.bfloat16)

    # Banded GEMM weights with the BN scale folded in (f32 fold, then one bf16 cast),
    # row taps stacked along the contraction axis, columns zero-padded to 128 lanes.
    w1b = band_weights(w1_hwio * s1[None, None, None, :], W)            # (K, W*Cin, W1*Cmid)
    w1s = jnp.pad(w1b, ((0, 0), (0, 0), (0, P1 - W1 * Cmid)))
    w1s = w1s.reshape(K * W * Cin, P1).astype(jnp.bfloat16)

    w2b = band_weights(w2_hwio * s2[None, None, None, :], W1)           # (K, W1*Cmid, W2*Cout)
    w2s = jnp.pad(w2b, ((0, 0), (0, P1 - W1 * Cmid), (0, P2 - W2 * Cout)))
    w2s = w2s.reshape(K * P1, P2).astype(jnp.bfloat16)

    b1t = jnp.pad(jnp.tile(b1, W1), (0, P1 - W1 * Cmid)).reshape(1, P1).astype(jnp.float32)
    b2t = jnp.pad(jnp.tile(b2, W2), (0, P2 - W2 * Cout)).reshape(1, P2).astype(jnp.float32)

    kernel = functools.partial(u_block_kernel, n_imgs=N, h1=H1, h2=H2)

    out_flat = pl.pallas_call(
        kernel,
        out_shape=jax.ShapeDtypeStruct((N * H2, P2), jnp.float32),
        grid_spec=pltpu.PrefetchScalarGridSpec(
            num_scalar_prefetch=0,
            grid=(1,),
            in_specs=[
                pl.BlockSpec((N * H1, K * W * Cin), lambda i: (0, 0)),
                pl.BlockSpec((K * W * Cin, P1), lambda i: (0, 0)),
                pl.BlockSpec((1, P1), lambda i: (0, 0)),
                pl.BlockSpec((K * P1, P2), lambda i: (0, 0)),
                pl.BlockSpec((1, P2), lambda i: (0, 0)),
            ],
            out_specs=pl.BlockSpec((N * H2, P2), lambda i: (0, 0)),
        ),
        compiler_params=pltpu.CompilerParams(
            dimension_semantics=("arbitrary",),
            vmem_limit_bytes=32 * 1024 * 1024),
    )(lhs1, w1s, b1t, w2s, b2t)

    out = out_flat[:, :W2 * Cout].reshape(N, H2, W2, Cout)
    return jnp.transpose(out, (0, 3, 1, 2))                              # NHWC -> NCHW


def init_params(key, in_chan, out_chan):
    """Deterministic synthetic parameters mirroring the nn.Module's shapes."""
    ks = jax.random.split(key, 10)
    # Conv weights (PyTorch OIHW) + biases (nn.Conv2d default bias=True).
    wc1 = 0.1 * jax.random.normal(ks[0], (out_chan, in_chan, K, K), jnp.float32)
    bc1 = 0.1 * jax.random.normal(ks[1], (out_chan,), jnp.float32)
    wc2 = 0.1 * jax.random.normal(ks[2], (out_chan, out_chan, K, K), jnp.float32)
    bc2 = 0.1 * jax.random.normal(ks[3], (out_chan,), jnp.float32)
    # BatchNorm params + running stats (eval mode).
    g1 = 1.0 + 0.1 * jax.random.normal(ks[4], (out_chan,), jnp.float32)
    be1 = 0.1 * jax.random.normal(ks[5], (out_chan,), jnp.float32)
    m1 = 0.05 * jax.random.normal(ks[6], (out_chan,), jnp.float32)
    v1 = 0.5 + jnp.abs(jax.random.normal(ks[7], (out_chan,), jnp.float32))
    g2 = 1.0 + 0.1 * jax.random.normal(ks[8], (out_chan,), jnp.float32)
    be2 = 0.1 * jax.random.normal(ks[9], (out_chan,), jnp.float32)
    m2 = jnp.zeros((out_chan,), jnp.float32)
    v2 = jnp.ones((out_chan,), jnp.float32)
    return (wc1, bc1, g1, be1, m1, v1), (wc2, bc2, g2, be2, m2, v2)


def fold_bn(wc_oihw, bc, gamma, beta, mean, var):
    """Return (w_hwio, scale, bias): relu(conv(x)*scale + bias) == relu(BN(conv(x)+bc))."""
    w_hwio = jnp.transpose(wc_oihw, (2, 3, 1, 0))             # OIHW -> HWIO
    scale = gamma / jnp.sqrt(var + EPS)
    bias = beta + (bc - mean) * scale
    return w_hwio, scale, bias


def reference_forward(x_nchw, p1, p2):
    """Pure-JAX reference of the PyTorch module (eval-mode BN)."""
    def conv(x, w, b):
        y = jax.lax.conv_general_dilated(
            x, w, (1, 1), "VALID",
            dimension_numbers=("NCHW", "OIHW", "NCHW"),
            precision=jax.lax.Precision.HIGHEST)
        return y + b[None, :, None, None]

    def bn(x, g, be, m, v):
        return ((x - m[None, :, None, None])
                / jnp.sqrt(v[None, :, None, None] + EPS)
                * g[None, :, None, None] + be[None, :, None, None])

    wc1, bc1, g1, be1, m1, v1 = p1
    wc2, bc2, g2, be2, m2, v2 = p2
    h = jax.nn.relu(bn(conv(x_nchw, wc1, bc1), g1, be1, m1, v1))
    return jax.nn.relu(bn(conv(h, wc2, bc2), g2, be2, m2, v2))


if __name__ == "__main__":
    batch, in_chan, out_chan, spatial = 2, 4, 8, 16

    key = jax.random.PRNGKey(0)
    k_x, k_p = jax.random.split(key)
    x = jax.random.normal(k_x, (batch, in_chan, spatial, spatial), jnp.float32)

    p1, p2 = init_params(k_p, in_chan, out_chan)
    w1_hwio, s1, b1 = fold_bn(*p1)
    w2_hwio, s2, b2 = fold_bn(*p2)

    y = u_block_forward(x, w1_hwio, s1, b1, w2_hwio, s2, b2)
    y = jax.block_until_ready(y)

    y_ref = jax.block_until_ready(reference_forward(x, p1, p2))

    assert y.shape == (batch, out_chan, spatial - 4, spatial - 4), y.shape
    # bf16 MXU operands / bf16 activations (f32 accumulation) vs the f32
    # HIGHEST-precision reference -> loosened tolerance.
    assert jnp.allclose(y, y_ref, rtol=2e-2, atol=2e-2), \
        f"max abs err = {jnp.max(jnp.abs(y - y_ref))}"
    print("KERNEL_OK")
</pallas_src>

<mosaic_0001>
module attributes {stable_mosaic.version = 11 : i64} {
  func.func @u_block_kernel(%arg0: i32, %arg1: memref<28x192xbf16, #tpu.memory_space<vmem>>, %arg2: memref<192x128xbf16, #tpu.memory_space<vmem>>, %arg3: memref<1x128xf32, #tpu.memory_space<vmem>>, %arg4: memref<384x128xbf16, #tpu.memory_space<vmem>>, %arg5: memref<1x128xf32, #tpu.memory_space<vmem>>, %arg6: memref<24x128xf32, #tpu.memory_space<vmem>>) attributes {dimension_semantics = [#tpu.dimension_semantics<arbitrary>], iteration_bounds = array<i64: 1>, scalar_prefetch = 0 : i64, scratch_operands = 0 : i64, tpu.core_type = #tpu.core_type<tc>, window_params = [{pipeline_mode = #tpu.pipeline_mode<synchronous>, transform_indices = @transform_0, window_bounds = array<i64: 28, 192>}, {pipeline_mode = #tpu.pipeline_mode<synchronous>, transform_indices = @transform_1, window_bounds = array<i64: 192, 128>}, {pipeline_mode = #tpu.pipeline_mode<synchronous>, transform_indices = @transform_2, window_bounds = array<i64: 1, 128>}, {pipeline_mode = #tpu.pipeline_mode<synchronous>, transform_indices = @transform_3, window_bounds = array<i64: 384, 128>}, {pipeline_mode = #tpu.pipeline_mode<synchronous>, transform_indices = @transform_4, window_bounds = array<i64: 1, 128>}, {pipeline_mode = #tpu.pipeline_mode<synchronous>, transform_indices = @transform_5, window_bounds = array<i64: 24, 128>}]} {
    %c0 = arith.constant 0 : index
    %c0_0 = arith.constant 0 : index
    %0 = vector.load %arg1[%c0, %c0_0] : memref<28x192xbf16, #tpu.memory_space<vmem>>, vector<28x192xbf16>
    %c0_1 = arith.constant 0 : index
    %c0_2 = arith.constant 0 : index
    %1 = vector.load %arg2[%c0_1, %c0_2] : memref<192x128xbf16, #tpu.memory_space<vmem>>, vector<192x128xbf16>
    %cst = arith.constant dense<0.000000e+00> : vector<28x128xf32>
    %2 = tpu.matmul %0, %1, %cst {dimension_numbers = #tpu.dot_dimension_numbers<[1], [0], [0], [1], [0, 0, 1, 1], [], []>} : vector<28x192xbf16>, vector<192x128xbf16>, vector<28x128xf32> -> vector<28x128xf32>
    %c0_3 = arith.constant 0 : index
    %c0_4 = arith.constant 0 : index
    %3 = vector.load %arg3[%c0_3, %c0_4] : memref<1x128xf32, #tpu.memory_space<vmem>>, vector<1x128xf32>
    %4 = vector.broadcast %3 : vector<1x128xf32> to vector<28x128xf32>
    %5 = arith.addf %2, %4 : vector<28x128xf32>
    %cst_5 = arith.constant 0.000000e+00 : f32
    %6 = vector.broadcast %cst_5 : f32 to vector<28x128xf32>
    %7 = arith.maximumf %5, %6 : vector<28x128xf32>
    %8 = arith.truncf %7 : vector<28x128xf32> to vector<28x128xbf16>
    %9 = vector.extract_strided_slice %8 {offsets = [0, 0], sizes = [12, 128], strides = [1, 1]} : vector<28x128xbf16> to vector<12x128xbf16>
    %10 = vector.extract_strided_slice %8 {offsets = [1, 0], sizes = [12, 128], strides = [1, 1]} : vector<28x128xbf16> to vector<12x128xbf16>
    %11 = vector.extract_strided_slice %8 {offsets = [2, 0], sizes = [12, 128], strides = [1, 1]} : vector<28x128xbf16> to vector<12x128xbf16>
    %12 = tpu.concatenate %9, %10, %11 in 1 : vector<12x128xbf16>, vector<12x128xbf16>, vector<12x128xbf16> -> vector<12x384xbf16>
    %13 = vector.extract_strided_slice %8 {offsets = [14, 0], sizes = [12, 128], strides = [1, 1]} : vector<28x128xbf16> to vector<12x128xbf16>
    %14 = vector.extract_strided_slice %8 {offsets = [15, 0], sizes = [12, 128], strides = [1, 1]} : vector<28x128xbf16> to vector<12x128xbf16>
    %15 = vector.extract_strided_slice %8 {offsets = [16, 0], sizes = [12, 128], strides = [1, 1]} : vector<28x128xbf16> to vector<12x128xbf16>
    %16 = tpu.concatenate %13, %14, %15 in 1 : vector<12x128xbf16>, vector<12x128xbf16>, vector<12x128xbf16> -> vector<12x384xbf16>
    %17 = tpu.concatenate %12, %16 in 0 : vector<12x384xbf16>, vector<12x384xbf16> -> vector<24x384xbf16>
    %c0_6 = arith.constant 0 : index
    %c0_7 = arith.constant 0 : index
    %18 = vector.load %arg4[%c0_6, %c0_7] : memref<384x128xbf16, #tpu.memory_space<vmem>>, vector<384x128xbf16>
    %cst_8 = arith.constant dense<0.000000e+00> : vector<24x128xf32>
    %19 = tpu.matmul %17, %18, %cst_8 {dimension_numbers = #tpu.dot_dimension_numbers<[1], [0], [0], [1], [0, 0, 1, 1], [], []>} : vector<24x384xbf16>, vector<384x128xbf16>, vector<24x128xf32> -> vector<24x128xf32>
    %c0_9 = arith.constant 0 : index
    %c0_10 = arith.constant 0 : index
    %20 = vector.load %arg5[%c0_9, %c0_10] : memref<1x128xf32, #tpu.memory_space<vmem>>, vector<1x128xf32>
    %21 = vector.broadcast %20 : vector<1x128xf32> to vector<24x128xf32>
    %22 = arith.addf %19, %21 : vector<24x128xf32>
    %cst_11 = arith.constant 0.000000e+00 : f32
    %23 = vector.broadcast %cst_11 : f32 to vector<24x128xf32>
    %24 = arith.maximumf %22, %23 : vector<24x128xf32>
    %c0_12 = arith.constant 0 : index
    %c0_13 = arith.constant 0 : index
    %25 = vector.load %arg6[%c0_12, %c0_13] : memref<24x128xf32, #tpu.memory_space<vmem>>, vector<24x128xf32>
    tpu.vector_store %arg6[%c0_12, %c0_13], %24 {strides = array<i32>} : memref<24x128xf32, #tpu.memory_space<vmem>>, vector<24x128xf32>,
    return
  }
  func.func @transform_0(%arg0: i32) -> (i32, i32) {
    %c0_i32 = arith.constant 0 : i32
    %c0_i32_0 = arith.constant 0 : i32
    %c0_i32_1 = arith.constant 0 : i32
    return %c0_i32, %c0_i32_0 : i32, i32
  }
  func.func @transform_1(%arg0: i32) -> (i32, i32) {
    %c0_i32 = arith.constant 0 : i32
    %c0_i32_0 = arith.constant 0 : i32
    %c0_i32_1 = arith.constant 0 : i32
    return %c0_i32, %c0_i32_0 : i32, i32
  }
  func.func @transform_2(%arg0: i32) -> (i32, i32) {
    %c0_i32 = arith.constant 0 : i32
    %c0_i32_0 = arith.constant 0 : i32
    %c0_i32_1 = arith.constant 0 : i32
    return %c0_i32, %c0_i32_0 : i32, i32
  }
  func.func @transform_3(%arg0: i32) -> (i32, i32) {
    %c0_i32 = arith.constant 0 : i32
    %c0_i32_0 = arith.constant 0 : i32
    %c0_i32_1 = arith.constant 0 : i32
    return %c0_i32, %c0_i32_0 : i32, i32
  }
  func.func @transform_4(%arg0: i32) -> (i32, i32) {
    %c0_i32 = arith.constant 0 : i32
    %c0_i32_0 = arith.constant 0 : i32
    %c0_i32_1 = arith.constant 0 : i32
    return %c0_i32, %c0_i32_0 : i32, i32
  }
  func.func @transform_5(%arg0: i32) -> (i32, i32) {
    %c0_i32 = arith.constant 0 : i32
    %c0_i32_0 = arith.constant 0 : i32
    %c0_i32_1 = arith.constant 0 : i32
    return %c0_i32, %c0_i32_0 : i32, i32
  }
}

</mosaic_0001>

<llo_original>
// kernel: tpu_custom_call.1
$region0: #{tpu_custom_call.1}
  #allocation0 [shape = 'u32[]', space=smem, size = 0x4, offset = 0x4, fixed_abs, tag = 'smem constant byte address 0x4 - core index']
  #allocation1 [shape = 'u32[144,128]{1,0:T(1,128)}', space=vmem, size = 0x12000, scoped, tag = 'internal scratch']
  %s0 = inlined_call_operand.hbm [shape: bf16[28,192], index: 0, kind: input, shape index: {}]
  %s1 = inlined_call_operand.hbm [shape: bf16[192,128], index: 1, kind: input, shape index: {}]
  %s2 = inlined_call_operand.vmem [shape: f32[1,128], index: 2, kind: input, shape index: {}]
  %s3 = inlined_call_operand.hbm [shape: bf16[384,128], index: 3, kind: input, shape index: {}]
  %s4 = inlined_call_operand.vmem [shape: f32[1,128], index: 4, kind: input, shape index: {}]
  %s5 = inlined_call_operand.hbm [shape: f32[24,128], index: 5, kind: output, shape index: {}]
  %s6 = sld [smem:[#allocation0]]
  $region42: #{tpu_custom_call.1} parent=0
    _
  %s8 = ssub.s32 1, %s6
  %s9 = scalar_select 0, %s8, %s6
  $region1: #{tpu_custom_call.1} parent=0
    #allocation2 [shape = 'u8[16384]{0}', space=vmem, size = 0x4000, scoped, tag = 'input window, operand 0, single buffered']
    #allocation3 [shape = 's32[1]{0}', space=sflag, size = 0x4, scoped, tag = 'scoped memory for tpu_custom_call.1']
    #allocation4 [shape = 's32[1]{0}', space=sflag, size = 0x4, scoped, tag = 'scoped memory for tpu_custom_call.1']
    #allocation5 [shape = 'u8[49152]{0}', space=vmem, size = 0xc000, scoped, tag = 'input window, operand 1, single buffered']
    #allocation6 [shape = 's32[1]{0}', space=sflag, size = 0x4, scoped, tag = 'scoped memory for tpu_custom_call.1']
    #allocation7 [shape = 'u8[98304]{0}', space=vmem, size = 0x18000, scoped, tag = 'input window, operand 3, single buffered']
    #allocation8 [shape = 'u8[12288]{0}', space=vmem, size = 0x3000, scoped, tag = 'output window, operand 0, single buffered']
    %10 = vsyncpa [#allocation3], 0
    %11 = vsyncpa [#allocation6], 0
    %12 = vsyncpa [#allocation4], 0
    // Predicated region
    $region2: #{tpu_custom_call.1} parent=1 // pred_check
      _
    $region3: #{tpu_custom_call.1} parent=1 // pred_check_branch
      %14 = sbr.rel (0) target = $region5
    $region4: #{tpu_custom_call.1} parent=1 // pred_region
      %s16 = ssub.s32 512, 512
      %17 = vsyncadd [#allocation3], %s16
      %s18 = sshll.u32 [#allocation2], 4
      %s19 = int_to_ptr.vmem [resolvable:$true] %s18
      %24 = dma.hbm_to_vmem [thread:$0]  %s0, 512, %s19, [#allocation3], 128, 128, 8
    $region5: #{tpu_custom_call.1} parent=1 // pred_fallthru
      _
    // Predicated region
    $region6: #{tpu_custom_call.1} parent=1 // pred_check
      _
    $region7: #{tpu_custom_call.1} parent=1 // pred_check_branch
      %26 = sbr.rel (0) target = $region9
    $region8: #{tpu_custom_call.1} parent=1 // pred_region
      %s28 = ssub.s32 1536, 1536
      %29 = vsyncadd [#allocation6], %s28
      %s30 = sshll.u32 [#allocation5], 4
      %s31 = int_to_ptr.vmem [resolvable:$true] %s30
      %36 = dma.hbm_to_vmem [thread:$0]  %s1, 1536, %s31, [#allocation6], 64, 64, 4
    $region9: #{tpu_custom_call.1} parent=1 // pred_fallthru
      _
    // Predicated region
    $region10: #{tpu_custom_call.1} parent=1 // pred_check
      _
    $region11: #{tpu_custom_call.1} parent=1 // pred_check_branch
      %38 = sbr.rel (0) target = $region13
    $region12: #{tpu_custom_call.1} parent=1 // pred_region
      _
    $region13: #{tpu_custom_call.1} parent=1 // pred_fallthru
      _
    // Predicated region
    $region14: #{tpu_custom_call.1} parent=1 // pred_check
      _
    $region15: #{tpu_custom_call.1} parent=1 // pred_check_branch
      %40 = sbr.rel (0) target = $region17
    $region16: #{tpu_custom_call.1} parent=1 // pred_region
      %s42 = ssub.s32 3072, 3072
      %43 = vsyncadd [#allocation6], %s42
      %s44 = sshll.u32 [#allocation7], 4
      %s45 = int_to_ptr.vmem [resolvable:$true] %s44
      %50 = dma.hbm_to_vmem [thread:$0]  %s3, 3072, %s45, [#allocation6], 64, 64, 4
    $region17: #{tpu_custom_call.1} parent=1 // pred_fallthru
      _
    // Predicated region
    $region18: #{tpu_custom_call.1} parent=1 // pred_check
      _
    $region19: #{tpu_custom_call.1} parent=1 // pred_check_branch
      %52 = sbr.rel (0) target = $region21
    $region20: #{tpu_custom_call.1} parent=1 // pred_region
      _
    $region21: #{tpu_custom_call.1} parent=1 // pred_fallthru
      _
    // Predicated region
    $region22: #{tpu_custom_call.1} parent=1 // pred_check
      _
    $region23: #{tpu_custom_call.1} parent=1 // pred_check_branch
      %54 = sbr.rel (0) target = $region25
    $region24: #{tpu_custom_call.1} parent=1 // pred_region
      %55 = dma.done [#allocation3], 512
    $region25: #{tpu_custom_call.1} parent=1 // pred_fallthru
      _
    // Predicated region
    $region26: #{tpu_custom_call.1} parent=1 // pred_check
      _
    $region27: #{tpu_custom_call.1} parent=1 // pred_check_branch
      %57 = sbr.rel (0) target = $region29
    $region28: #{tpu_custom_call.1} parent=1 // pred_region
      %58 = dma.done [#allocation6], 1536
    $region29: #{tpu_custom_call.1} parent=1 // pred_fallthru
      _
    // Predicated region
    $region30: #{tpu_custom_call.1} parent=1 // pred_check
      _
    $region31: #{tpu_custom_call.1} parent=1 // pred_check_branch
      %60 = sbr.rel (0) target = $region33
    $region32: #{tpu_custom_call.1} parent=1 // pred_region
      %61 = dma.done [#allocation6], 3072
    $region33: #{tpu_custom_call.1} parent=1 // pred_fallthru
      _
    %v63 = vld [vmem:[#allocation2] sm:$0xff]
    %v64 = vld [vmem:[#allocation2 + $0x8] sm:$0xff]
    %v65 = vld [vmem:[#allocation2 + $0x10] sm:$0xff]
    %v66 = vld [vmem:[#allocation2 + $0x18] sm:$0x33]
    %v67 = vld [vmem:[#allocation5] sm:$0xf]
    %v68 = vld [vmem:[#allocation5 + $0x4] sm:$0xf]
    %v69 = vld [vmem:[#allocation5 + $0x8] sm:$0xf]
    %v70 = vld [vmem:[#allocation5 + $0xc] sm:$0xf]
    %v71 = vld [vmem:[#allocation5 + $0x10] sm:$0xf]
    %v72 = vld [vmem:[#allocation5 + $0x14] sm:$0xf]
    %v73 = vld [vmem:[#allocation5 + $0x18] sm:$0xf]
    %v74 = vld [vmem:[#allocation5 + $0x1c] sm:$0xf]
    %v75 = vld [vmem:[#allocation5 + $0x20] sm:$0xf]
    %v76 = vld [vmem:[#allocation5 + $0x24] sm:$0xf]
    %v77 = vld [vmem:[#allocation5 + $0x28] sm:$0xf]
    %v78 = vld [vmem:[#allocation5 + $0x2c] sm:$0xf]
    %v79 = vld [vmem:[#allocation5 + $0x30] sm:$0xf]
    %v80 = vld [vmem:[#allocation5 + $0x34] sm:$0xf]
    %v81 = vld [vmem:[#allocation5 + $0x38] sm:$0xf]
    %v82 = vld [vmem:[#allocation5 + $0x3c] sm:$0xf]
    %v83 = vld [vmem:[#allocation5 + $0x40] sm:$0xf]
    %v84 = vld [vmem:[#allocation5 + $0x44] sm:$0xf]
    %v85 = vld [vmem:[#allocation5 + $0x48] sm:$0xf]
    %v86 = vld [vmem:[#allocation5 + $0x4c] sm:$0xf]
    %v87 = vld [vmem:[#allocation5 + $0x50] sm:$0xf]
    %v88 = vld [vmem:[#allocation5 + $0x54] sm:$0xf]
    %v89 = vld [vmem:[#allocation5 + $0x58] sm:$0xf]
    %v90 = vld [vmem:[#allocation5 + $0x5c] sm:$0xf]
    %v91 = vld [vmem:[%s2] sm:$0x1]
    %v93 = vlaneseq
    %v94 = vshrl.u32 %v93, 7
    %v95 = vsub.s32 0, %v94
    %v96 = vrot.slane %v91, %v95
    %v102 = vunpack.c.l.b16 %v63
    %v103 = vunpack.c.h.b16 %v63
    %v104 = vunpack.c.l.b16 %v64
    %v105 = vunpack.c.h.b16 %v64
    %v106 = vunpack.c.l.b16 %v65
    %v107 = vunpack.c.h.b16 %v65
    %v108 = vunpack.c.l.b16 %v66
    %v109 = vunpack.c.h.b16 %v66
    %v110 = vpack.c.b16 %v104, %v102
    %v111 = vpack.c.b16 %v105, %v103
    %v112 = vpack.c.b16 %v108, %v106
    %v113 = vpack.c.b16 %v109, %v107
    %v140 = vunpack.c.l.b16 %v67
    %v141 = vunpack.c.l.b16 %v68
    %v142 = vunpack.c.l.b16 %v69
    %v143 = vunpack.c.l.b16 %v70
    %v144 = vunpack.c.l.b16 %v71
    %v145 = vunpack.c.l.b16 %v72
    %v146 = vunpack.c.l.b16 %v73
    %v147 = vunpack.c.l.b16 %v74
    %v148 = vunpack.c.l.b16 %v75
    %v149 = vunpack.c.l.b16 %v76
    %v150 = vunpack.c.l.b16 %v77
    %v151 = vunpack.c.l.b16 %v78
    %v152 = vunpack.c.l.b16 %v79
    %v153 = vunpack.c.l.b16 %v80
    %v154 = vunpack.c.l.b16 %v81
    %v155 = vunpack.c.l.b16 %v82
    %v156 = vunpack.c.l.b16 %v83
    %v157 = vunpack.c.l.b16 %v84
    %v158 = vunpack.c.l.b16 %v85
    %v159 = vunpack.c.l.b16 %v86
    %v160 = vunpack.c.l.b16 %v87
    %v161 = vunpack.c.l.b16 %v88
    %v162 = vunpack.c.l.b16 %v89
    %v163 = vunpack.c.l.b16 %v90
    %v164 = vpack.c.b16 %v141, %v140
    %v165 = vpack.c.b16 %v143, %v142
    %v166 = vpack.c.b16 %v145, %v144
    %v167 = vpack.c.b16 %v147, %v146
    %v168 = vpack.c.b16 %v149, %v148
    %v169 = vpack.c.b16 %v151, %v150
    %v170 = vpack.c.b16 %v153, %v152
    %v171 = vpack.c.b16 %v155, %v154
    %v172 = vpack.c.b16 %v157, %v156
    %v173 = vpack.c.b16 %v159, %v158
    %v174 = vpack.c.b16 %v161, %v160
    %v175 = vpack.c.b16 %v163, %v162
    %vm188 = vcmask 523264
    %v190 = vsel %vm188, %v111, 0
    %v193 = vsel %vm188, %v113, 0
    %195 = vmatprep.subr.bf16.mxu0 0
    %196 = vmatpush1.bf16.msra.mxu0 %v164
    %197 = vmatprep.subr.bf16.mxu0 0
    %198 = vmatpush1.bf16.msra.mxu0 %v165
    %199 = vmatprep.subr.bf16.mxu0 0
    %200 = vmatpush1.bf16.msra.mxu0 %v166
    %201 = vmatprep.subr.bf16.mxu0 0
    %202 = vmatpush1.bf16.msra.mxu0 %v167
    %203 = vmatprep.subr.bf16.mxu0 0
    %204 = vmatpush1.bf16.msra.mxu0 %v168
    %205 = vmatprep.subr.bf16.mxu0 0
    %206 = vmatpush1.bf16.msra.mxu0 %v169
    %207 = vmatprep.subr.bf16.mxu0 0
    %208 = vmatpush1.bf16.msra.mxu0 %v170
    %209 = vmatprep.subr.bf16.mxu0 0
    %210 = vmatpush1.bf16.msra.mxu0 %v171
    %211 = vmatprep.subr.bf16.mxu0 0
    %212 = vmatpush1.bf16.msra.mxu0 %v172
    %213 = vmatprep.subr.bf16.mxu0 0
    %214 = vmatpush1.bf16.msra.mxu0 %v173
    %215 = vmatprep.subr.bf16.mxu0 0
    %216 = vmatpush1.bf16.msra.mxu0 %v174
    %217 = vmatprep.subr.bf16.mxu0 0
    %218 = vmatpush1.bf16.msra.mxu0 %v175
    %219 = vmatprep.subr.bf16.mxu0 0
    %220 = vmatpush1.bf16.msra.mxu0 0
    %221 = vmatprep.subr.bf16.mxu0 0
    %222 = vmatpush1.bf16.msra.mxu0 0
    %223 = vmatprep.subr.bf16.mxu0 0
    %224 = vmatpush1.bf16.msra.mxu0 0
    %225 = vmatprep.subr.bf16.mxu0 0
    %226 = vmatpush1.bf16.msra.mxu0 0
    %227 = vmatprep.mubr.bf16.mxu0 %v190
    %228 = vmatmul.mubr.bf16.gmra.mrb[0].mxu0 %v110
    %v229 = vpop.f32.mrb[0].mxu0
    %v230 = vadd.f32 %v96, %v229
    %v231 = vpop.f32.mrb[0].mxu0
    %v232 = vpop.f32.mrb[0].mxu0
    %v233 = vadd.f32 %v96, %v232
    %v234 = vpop.f32.mrb[0].mxu0
    %235 = vmatprep.mubr.bf16.mxu0 %v193
    %236 = vmatmul.mubr.bf16.gmra.mrb[0].mxu0 %v112
    %v237 = vpop.f32.mrb[0].mxu0
    %v238 = vadd.f32 %v96, %v237
    %v239 = vpop.f32.mrb[0].mxu0
    %v240 = vpop.f32.mrb[0].mxu0
    %v241 = vadd.f32 %v96, %v240
    %v242 = vpop.f32.mrb[0].mxu0
    %243 = vdwg.mxu0
    %v244 = vmax.f32 %v230, 0.0
    %v245 = vmax.f32 %v233, 0.0
    %v246 = vmax.f32 %v238, 0.0
    %v247 = vmax.f32 %v241, 0.0
    %v248 = vpack.c.bf16 %v245, %v244
    %v249 = vpack.c.bf16 %v247, %v246
    %v251 = vshrl.u32 %v248, 16
    %v253 = vshll.u32 %v248, 16
    %v255 = vrot.slane %v253, 1
    %v256 = vor.u32 %v251, %v255
    %v258 = vrot.slane %v248, 1
    %vm259 = vsmask.f32 7424
    %v261 = vshll.u32 %v249, 16
    %v263 = vrot.slane %v261, 1
    %v264 = vsel %vm259, %v251, %v263
    %v265 = vshrl.u32 %v249, 16
    %v267 = vor.u32 %v265, %v263
    %v269 = vrot.slane %v249, 1
    %vm270 = vcmask 1046528
    %v271 = vsel %vm270, %v258, %v269
    %v272 = vrot.slane %v264, 1
    %v273 = vrot.slane %v267, 1
    %v274 = vsel %vm270, %v272, %v273
    %v275 = vrot.slane %v269, 1
    %v276 = vsel %vm270, %v275, %v275
    %vm280 = vcmask 1045504
    %v282 = vsel %vm280, %v248, %v271
    %v286 = vsel %vm280, %v256, %v274
    %v290 = vsel %vm280, %v258, %v276
    %v292 = vld [vmem:[#allocation7] sm:$0xf]
    %v293 = vld [vmem:[#allocation7 + $0x4] sm:$0xf]
    %v294 = vld [vmem:[#allocation7 + $0x8] sm:$0xf]
    %v295 = vld [vmem:[#allocation7 + $0xc] sm:$0xf]
    %v296 = vld [vmem:[#allocation7 + $0x10] sm:$0xf]
    %v297 = vld [vmem:[#allocation7 + $0x14] sm:$0xf]
    %v298 = vld [vmem:[#allocation7 + $0x18] sm:$0xf]
    %v299 = vld [vmem:[#allocation7 + $0x1c] sm:$0xf]
    %v300 = vld [vmem:[#allocation7 + $0x20] sm:$0xf]
    %v301 = vld [vmem:[#allocation7 + $0x24] sm:$0xf]
    %v302 = vld [vmem:[#allocation7 + $0x28] sm:$0xf]
    %v303 = vld [vmem:[#allocation7 + $0x2c] sm:$0xf]
    %v304 = vld [vmem:[#allocation7 + $0x30] sm:$0xf]
    %v305 = vld [vmem:[#allocation7 + $0x34] sm:$0xf]
    %v306 = vld [vmem:[#allocation7 + $0x38] sm:$0xf]
    %v307 = vld [vmem:[#allocation7 + $0x3c] sm:$0xf]
    %v308 = vld [vmem:[#allocation7 + $0x40] sm:$0xf]
    %v309 = vld [vmem:[#allocation7 + $0x44] sm:$0xf]
    %v310 = vld [vmem:[#allocation7 + $0x48] sm:$0xf]
    %v311 = vld [vmem:[#allocation7 + $0x4c] sm:$0xf]
    %v312 = vld [vmem:[#allocation7 + $0x50] sm:$0xf]
    %v313 = vld [vmem:[#allocation7 + $0x54] sm:$0xf]
    %v314 = vld [vmem:[#allocation7 + $0x58] sm:$0xf]
    %v315 = vld [vmem:[#allocation7 + $0x5c] sm:$0xf]
    %v316 = vld [vmem:[#allocation7 + $0x60] sm:$0xf]
    %v317 = vld [vmem:[#allocation7 + $0x64] sm:$0xf]
    %v318 = vld [vmem:[#allocation7 + $0x68] sm:$0xf]
    %v319 = vld [vmem:[#allocation7 + $0x6c] sm:$0xf]
    %v320 = vld [vmem:[#allocation7 + $0x70] sm:$0xf]
    %v321 = vld [vmem:[#allocation7 + $0x74] sm:$0xf]
    %v322 = vld [vmem:[#allocation7 + $0x78] sm:$0xf]
    %v323 = vld [vmem:[#allocation7 + $0x7c] sm:$0xf]
    %v324 = vld [vmem:[#allocation7 + $0x80] sm:$0xf]
    %v325 = vld [vmem:[#allocation7 + $0x84] sm:$0xf]
    %v326 = vld [vmem:[#allocation7 + $0x88] sm:$0xf]
    %v327 = vld [vmem:[#allocation7 + $0x8c] sm:$0xf]
    %v328 = vld [vmem:[#allocation7 + $0x90] sm:$0xf]
    %v329 = vld [vmem:[#allocation7 + $0x94] sm:$0xf]
    %v330 = vld [vmem:[#allocation7 + $0x98] sm:$0xf]
    %v331 = vld [vmem:[#allocation7 + $0x9c] sm:$0xf]
    %v332 = vld [vmem:[#allocation7 + $0xa0] sm:$0xf]
    %v333 = vld [vmem:[#allocation7 + $0xa4] sm:$0xf]
    %v334 = vld [vmem:[#allocation7 + $0xa8] sm:$0xf]
    %v335 = vld [vmem:[#allocation7 + $0xac] sm:$0xf]
    %v336 = vld [vmem:[#allocation7 + $0xb0] sm:$0xf]
    %v337 = vld [vmem:[#allocation7 + $0xb4] sm:$0xf]
    %v338 = vld [vmem:[#allocation7 + $0xb8] sm:$0xf]
    %v339 = vld [vmem:[#allocation7 + $0xbc] sm:$0xf]
    %v340 = vld [vmem:[%s4] sm:$0x1]
    %v342 = vlaneseq
    %v343 = vshrl.u32 %v342, 7
    %v344 = vsub.s32 0, %v343
    %v345 = vrot.slane %v340, %v344
    %v395 = vunpack.c.l.b16 %v292
    %v396 = vunpack.c.l.b16 %v293
    %v397 = vunpack.c.l.b16 %v294
    %v398 = vunpack.c.l.b16 %v295
    %v399 = vunpack.c.l.b16 %v296
    %v400 = vunpack.c.l.b16 %v297
    %v401 = vunpack.c.l.b16 %v298
    %v402 = vunpack.c.l.b16 %v299
    %v403 = vunpack.c.l.b16 %v300
    %v404 = vunpack.c.l.b16 %v301
    %v405 = vunpack.c.l.b16 %v302
    %v406 = vunpack.c.l.b16 %v303
    %v407 = vunpack.c.l.b16 %v304
    %v408 = vunpack.c.l.b16 %v305
    %v409 = vunpack.c.l.b16 %v306
    %v410 = vunpack.c.l.b16 %v307
    %v411 = vunpack.c.l.b16 %v308
    %v412 = vunpack.c.l.b16 %v309
    %v413 = vunpack.c.l.b16 %v310
    %v414 = vunpack.c.l.b16 %v311
    %v415 = vunpack.c.l.b16 %v312
    %v416 = vunpack.c.l.b16 %v313
    %v417 = vunpack.c.l.b16 %v314
    %v418 = vunpack.c.l.b16 %v315
    %v419 = vunpack.c.l.b16 %v316
    %v420 = vunpack.c.l.b16 %v317
    %v421 = vunpack.c.l.b16 %v318
    %v422 = vunpack.c.l.b16 %v319
    %v423 = vunpack.c.l.b16 %v320
    %v424 = vunpack.c.l.b16 %v321
    %v425 = vunpack.c.l.b16 %v322
    %v426 = vunpack.c.l.b16 %v323
    %v427 = vunpack.c.l.b16 %v324
    %v428 = vunpack.c.l.b16 %v325
    %v429 = vunpack.c.l.b16 %v326
    %v430 = vunpack.c.l.b16 %v327
    %v431 = vunpack.c.l.b16 %v328
    %v432 = vunpack.c.l.b16 %v329
    %v433 = vunpack.c.l.b16 %v330
    %v434 = vunpack.c.l.b16 %v331
    %v435 = vunpack.c.l.b16 %v332
    %v436 = vunpack.c.l.b16 %v333
    %v437 = vunpack.c.l.b16 %v334
    %v438 = vunpack.c.l.b16 %v335
    %v439 = vunpack.c.l.b16 %v336
    %v440 = vunpack.c.l.b16 %v337
    %v441 = vunpack.c.l.b16 %v338
    %v442 = vunpack.c.l.b16 %v339
    %v443 = vpack.c.b16 %v396, %v395
    %v444 = vpack.c.b16 %v398, %v397
    %v445 = vpack.c.b16 %v400, %v399
    %v446 = vpack.c.b16 %v402, %v401
    %v447 = vpack.c.b16 %v404, %v403
    %v448 = vpack.c.b16 %v406, %v405
    %v449 = vpack.c.b16 %v408, %v407
    %v450 = vpack.c.b16 %v410, %v409
    %v451 = vpack.c.b16 %v412, %v411
    %v452 = vpack.c.b16 %v414, %v413
    %v453 = vpack.c.b16 %v416, %v415
    %v454 = vpack.c.b16 %v418, %v417
    %v455 = vpack.c.b16 %v420, %v419
    %v456 = vpack.c.b16 %v422, %v421
    %v457 = vpack.c.b16 %v424, %v423
    %v458 = vpack.c.b16 %v426, %v425
    %v459 = vpack.c.b16 %v428, %v427
    %v460 = vpack.c.b16 %v430, %v429
    %v461 = vpack.c.b16 %v432, %v431
    %v462 = vpack.c.b16 %v434, %v433
    %v463 = vpack.c.b16 %v436, %v435
    %v464 = vpack.c.b16 %v438, %v437
    %v465 = vpack.c.b16 %v440, %v439
    %v466 = vpack.c.b16 %v442, %v441
    %491 = vmatprep.subr.bf16.mxu0 0
    %492 = vmatpush1.bf16.msra.mxu0 %v443
    %493 = vmatprep.subr.bf16.mxu0 0
    %494 = vmatpush1.bf16.msra.mxu0 %v444
    %495 = vmatprep.subr.bf16.mxu0 0
    %496 = vmatpush1.bf16.msra.mxu0 %v445
    %497 = vmatprep.subr.bf16.mxu0 0
    %498 = vmatpush1.bf16.msra.mxu0 %v446
    %499 = vmatprep.subr.bf16.mxu0 0
    %500 = vmatpush1.bf16.msra.mxu0 %v447
    %501 = vmatprep.subr.bf16.mxu0 0
    %502 = vmatpush1.bf16.msra.mxu0 %v448
    %503 = vmatprep.subr.bf16.mxu0 0
    %504 = vmatpush1.bf16.msra.mxu0 %v449
    %505 = vmatprep.subr.bf16.mxu0 0
    %506 = vmatpush1.bf16.msra.mxu0 %v450
    %507 = vmatprep.subr.bf16.mxu0 0
    %508 = vmatpush1.bf16.msra.mxu0 %v451
    %509 = vmatprep.subr.bf16.mxu0 0
    %510 = vmatpush1.bf16.msra.mxu0 %v452
    %511 = vmatprep.subr.bf16.mxu0 0
    %512 = vmatpush1.bf16.msra.mxu0 %v453
    %513 = vmatprep.subr.bf16.mxu0 0
    %514 = vmatpush1.bf16.msra.mxu0 %v454
    %515 = vmatprep.subr.bf16.mxu0 0
    %516 = vmatpush1.bf16.msra.mxu0 %v455
    %517 = vmatprep.subr.bf16.mxu0 0
    %518 = vmatpush1.bf16.msra.mxu0 %v456
    %519 = vmatprep.subr.bf16.mxu0 0
    %520 = vmatpush1.bf16.msra.mxu0 %v457
    %521 = vmatprep.subr.bf16.mxu0 0
    %522 = vmatpush1.bf16.msra.mxu0 %v458
    %523 = vmatprep.mubr.bf16.mxu0 %v286
    %524 = vmatmul.mubr.bf16.gmra.mrb[0].mxu0 %v282
    %v525 = vpop.f32.mrb[0].mxu0
    %v526 = vadd.f32 %v345, %v525
    %v527 = vpop.f32.mrb[0].mxu0
    %v528 = vpop.f32.mrb[0].mxu0
    %v529 = vadd.f32 %v345, %v528
    %v530 = vpop.f32.mrb[0].mxu0
    %531 = vmatprep.mubr.bf16.mxu0 %v273
    %532 = vmatmul.mubr.bf16.gmra.mrb[0].mxu0 %v269
    %v533 = vpop.f32.mrb[0].mxu0
    %v534 = vadd.f32 %v345, %v533
    %v535 = vpop.f32.mrb[0].mxu0
    %v536 = vpop.f32.mrb[0].mxu0
    %v537 = vpop.f32.mrb[0].mxu0
    %538 = vdwg.mxu0
    %539 = vmatprep.subr.bf16.mxu0 0
    %540 = vmatpush1.bf16.msra.mxu0 %v459
    %541 = vmatprep.subr.bf16.mxu0 0
    %542 = vmatpush1.bf16.msra.mxu0 %v460
    %543 = vmatprep.subr.bf16.mxu0 0
    %544 = vmatpush1.bf16.msra.mxu0 %v461
    %545 = vmatprep.subr.bf16.mxu0 0
    %546 = vmatpush1.bf16.msra.mxu0 %v462
    %547 = vmatprep.subr.bf16.mxu0 0
    %548 = vmatpush1.bf16.msra.mxu0 %v463
    %549 = vmatprep.subr.bf16.mxu0 0
    %550 = vmatpush1.bf16.msra.mxu0 %v464
    %551 = vmatprep.subr.bf16.mxu0 0
    %552 = vmatpush1.bf16.msra.mxu0 %v465
    %553 = vmatprep.subr.bf16.mxu0 0
    %554 = vmatpush1.bf16.msra.mxu0 %v466
    %555 = vmatprep.subr.bf16.mxu0 0
    %556 = vmatpush1.bf16.msra.mxu0 0
    %557 = vmatprep.subr.bf16.mxu0 0
    %558 = vmatpush1.bf16.msra.mxu0 0
    %559 = vmatprep.subr.bf16.mxu0 0
    %560 = vmatpush1.bf16.msra.mxu0 0
    %561 = vmatprep.subr.bf16.mxu0 0
    %562 = vmatpush1.bf16.msra.mxu0 0
    %563 = vmatprep.subr.bf16.mxu0 0
    %564 = vmatpush1.bf16.msra.mxu0 0
    %565 = vmatprep.subr.bf16.mxu0 0
    %566 = vmatpush1.bf16.msra.mxu0 0
    %567 = vmatprep.subr.bf16.mxu0 0
    %568 = vmatpush1.bf16.msra.mxu0 0
    %569 = vmatprep.subr.bf16.mxu0 0
    %570 = vmatpush1.bf16.msra.mxu0 0
    %571 = vmatprep.mubr.bf16.mxu0 0
    %572 = vmatmul.mubr.bf16.gmra.mrb[0].mxu0 %v290
    %v573 = vpop.f32.mrb[0].mxu0
    %v574 = vadd.f32 %v526, %v573
    %v575 = vpop.f32.mrb[0].mxu0
    %v576 = vpop.f32.mrb[0].mxu0
    %v577 = vadd.f32 %v529, %v576
    %v578 = vpop.f32.mrb[0].mxu0
    %579 = vmatprep.mubr.bf16.mxu0 0
    %580 = vmatmul.mubr.bf16.gmra.mrb[0].mxu0 %v275
    %v581 = vpop.f32.mrb[0].mxu0
    %v582 = vadd.f32 %v534, %v581
    %v583 = vpop.f32.mrb[0].mxu0
    %v584 = vpop.f32.mrb[0].mxu0
    %v585 = vpop.f32.mrb[0].mxu0
    %586 = vdwg.mxu0
    %v587 = vmax.f32 %v574, 0.0
    %v588 = vmax.f32 %v577, 0.0
    %v589 = vmax.f32 %v582, 0.0
    %590 = vst [vmem:[#allocation8] sm:$0xff] %v587
    %591 = vst [vmem:[#allocation8 + $0x8] sm:$0xff] %v588
    %592 = vst [vmem:[#allocation8 + $0x10] sm:$0xff] %v589
    // Predicated region
    $region34: #{tpu_custom_call.1} parent=1 // pred_check
      _
    $region35: #{tpu_custom_call.1} parent=1 // pred_check_branch
      %594 = sbr.rel (0) target = $region37
    $region36: #{tpu_custom_call.1} parent=1 // pred_region
      %s596 = ssub.s32 384, 384
      %597 = vsyncadd [#allocation4], %s596
      %s598 = sshll.u32 [#allocation8], 4
      %s599 = int_to_ptr.vmem [resolvable:$true] %s598
      %604 = dma.vmem_to_hbm [thread:$0]  %s599, 384, %s5, [#allocation4], 128, 128, 8
    $region37: #{tpu_custom_call.1} parent=1 // pred_fallthru
      _
    // Predicated region
    $region38: #{tpu_custom_call.1} parent=1 // pred_check
      _
    $region39: #{tpu_custom_call.1} parent=1 // pred_check_branch
      %606 = sbr.rel (0) target = $region41
    $region40: #{tpu_custom_call.1} parent=1 // pred_region
      %607 = dma.done [#allocation4], 384
    $region41: #{tpu_custom_call.1} parent=1 // pred_fallthru
      _
    %608 = vsyncpa [#allocation3], 1
    %609 = vsyncpa [#allocation6], 1
    %610 = vsyncpa [#allocation4], 1

</llo_original>
